<compile_context>
chip_gen: v6e
topology: v6e:2x2x1
jax: 0.10.0
libtpu: 0.0.40
codegen_flags: <defaults>
</compile_context>

<pallas_src>
import functools

import jax
import jax.numpy as jnp
from jax.experimental import pallas as pl
from jax.experimental.pallas import tpu as pltpu

LANES = 128      # TPU lane width; also hidden-1 width
H1 = 128         # layer1 output width
H2 = 64          # layer2 output width (zero-padded to LANES inside the kernel)


def _round_up(n, m):
    return ((n + m - 1) // m) * m


def pack_params(params):
    """Pack (w1,b1,w2,b2,w3,b3) into one zero-padded (rows, 128) f32 slab.

    Every section is padded to a multiple of 8 rows (sublane tile) and 128
    columns (lane tile) so in-kernel static slices stay tile-aligned.
    Returns (slab, offsets dict of starting rows).
    """
    names = ("w1", "b1", "w2", "b2", "w3", "b3")
    sections, offsets = [], {}
    row = 0
    for name, arr in zip(names, params):
        r, c = arr.shape
        pad_rows = _round_up(r, 8) if name.startswith("b") or name != "w3" else _round_up(r, LANES)
        if name == "w3":
            pad_rows = _round_up(r, LANES)   # pad hidden-2 rows 64 -> 128
        padded = jnp.zeros((pad_rows, LANES), jnp.float32).at[:r, :c].set(
            arr.astype(jnp.float32))
        offsets[name] = row
        sections.append(padded)
        row += pad_rows
    slab = jnp.concatenate(sections, axis=0)
    return slab, offsets


def _make_kernel(n_in, offsets):
    w1o, b1o = offsets["w1"], offsets["b1"]
    w2o, b2o = offsets["w2"], offsets["b2"]
    w3o, b3o = offsets["w3"], offsets["b3"]

    def kernel(x_ref, p_ref, o_ref):
        mxu_dtype = p_ref.dtype                       # f32 or bf16 operands
        x = x_ref[...].astype(jnp.float32)            # (TB, n_in)

        # ---- unpack params with static, tile-aligned row slices ----
        w1 = p_ref[w1o:w1o + n_in, :].astype(jnp.float32)   # (n_in, 128)
        b1 = p_ref[b1o:b1o + 1, :].astype(jnp.float32)      # (1, 128)
        w2 = p_ref[w2o:w2o + H1, :]                         # (128, 128), cols>=64 zero
        b2 = p_ref[b2o:b2o + 1, :].astype(jnp.float32)      # (1, 128)
        w3 = p_ref[w3o:w3o + LANES, :]                      # (128, 128), pad rows/cols zero
        b3 = p_ref[b3o:b3o + 1, :].astype(jnp.float32)      # (1, 128)

        # ---- layer 1 on the VPU: K = n_in is far too small for the MXU ----
        h1 = jnp.broadcast_to(b1, (x.shape[0], LANES))
        for k in range(n_in):                        # static unroll, n_in tiny
            h1 = h1 + x[:, k:k + 1] * w1[k:k + 1, :]
        h1 = jnp.maximum(h1, 0.0)

        # ---- layers 2 & 3 on the MXU, lane-dense 128-wide (zero padded) ----
        h2 = jnp.dot(h1.astype(mxu_dtype), w2, preferred_element_type=jnp.float32)
        h2 = jnp.maximum(h2 + b2, 0.0)               # bias/ReLU stay f32 (v5e VPU)
        out = jnp.dot(h2.astype(mxu_dtype), w3, preferred_element_type=jnp.float32)
        o_ref[...] = (out + b3).astype(o_ref.dtype)  # (TB, 128) lane-dense store

    return kernel


@functools.partial(jax.jit, static_argnames=("block_b", "use_bf16_mxu"))
def dqn_forward(x, params, *, block_b=None, use_bf16_mxu=False):
    w1, b1, w2, b2, w3, b3 = params
    n_in = w1.shape[0]
    n_out = w3.shape[1]
    B = x.shape[0]

    slab, offsets = pack_params(params)
    p_rows = slab.shape[0]

    # Batch tile: single tile for small B; a divisor of B otherwise so every
    # block is full (keeps the (8,128) rule satisfied for arbitrary B).
    if block_b is None:
        tb = min(B, 512)
        while B % tb:
            tb //= 2
        tb = max(tb, 1)
    else:
        tb = block_b
    grid = (pl.cdiv(B, tb),)

    mxu_dtype = jnp.bfloat16 if use_bf16_mxu else jnp.float32
    x_in = x.astype(mxu_dtype) if use_bf16_mxu else x
    slab_in = slab.astype(mxu_dtype) if use_bf16_mxu else slab

    itemsize = jnp.dtype(mxu_dtype).itemsize
    flops = 2 * B * (n_in * H1 + H1 * H2 + H2 * n_out)
    bytes_accessed = (x_in.size + slab_in.size) * itemsize + B * LANES * 4
    cost = pl.CostEstimate(flops=flops, transcendentals=0,
                           bytes_accessed=bytes_accessed)

    kernel = _make_kernel(n_in, offsets)

    out_padded = pl.pallas_call(
        kernel,
        out_shape=jax.ShapeDtypeStruct((B, LANES), jnp.float32),
        grid=grid,
        in_specs=[
            pl.BlockSpec((tb, n_in), lambda i: (i, 0),
                         memory_space=pltpu.MemorySpace.VMEM),
            pl.BlockSpec((p_rows, LANES), lambda i: (0, 0),
                         memory_space=pltpu.MemorySpace.VMEM),
        ],
        out_specs=pl.BlockSpec((tb, LANES), lambda i: (i, 0),
                               memory_space=pltpu.MemorySpace.VMEM),
        compiler_params=pltpu.CompilerParams(
            dimension_semantics=("parallel",)),
        cost_estimate=cost,
    )(x_in, slab_in)

    # Lane-dense kernel output; slice the real Q-values in the wrapper.
    return out_padded[:, :n_out]


def init_dqn_params(key, n_inputs, n_outputs):
    """Deterministic PyTorch-style init: U(-1/sqrt(fan_in), 1/sqrt(fan_in))."""
    dims = [(n_inputs, H1), (H1, H2), (H2, n_outputs)]
    params = []
    for fan_in, fan_out in dims:
        key, kw, kb = jax.random.split(key, 3)
        bound = 1.0 / (fan_in ** 0.5)
        w = jax.random.uniform(kw, (fan_in, fan_out), jnp.float32, -bound, bound)
        b = jax.random.uniform(kb, (1, fan_out), jnp.float32, -bound, bound)
        params += [w, b]
    return tuple(params)


def dqn_reference(x, params):
    w1, b1, w2, b2, w3, b3 = params
    h1 = jnp.maximum(x @ w1 + b1, 0.0)
    h2 = jnp.maximum(h1 @ w2 + b2, 0.0)
    return h2 @ w3 + b3


if __name__ == "__main__":
    # DQN for a small env (CartPole-like): 4 state inputs, 2 actions.
    B, N_IN, N_OUT = 8, 4, 2

    key = jax.random.PRNGKey(0)
    key, kx = jax.random.split(key)
    x = jax.random.normal(kx, (B, N_IN), dtype=jnp.float32)
    params = init_dqn_params(key, N_IN, N_OUT)

    out = dqn_forward(x, params)
    out = jax.block_until_ready(out)

    ref = dqn_reference(x, params)
    assert out.shape == (B, N_OUT)
    assert jnp.allclose(out, ref, atol=1e-5, rtol=1e-5)

    print("KERNEL_OK")
</pallas_src>

<mosaic_0001>
module attributes {stable_mosaic.version = 11 : i64} {
  func.func @kernel(%arg0: i32, %arg1: memref<8x4xf32, #tpu.memory_space<vmem>>, %arg2: memref<288x128xf32, #tpu.memory_space<vmem>>, %arg3: memref<8x128xf32, #tpu.memory_space<vmem>>) attributes {dimension_semantics = [#tpu.dimension_semantics<parallel>], iteration_bounds = array<i64: 1>, scalar_prefetch = 0 : i64, scratch_operands = 0 : i64, tpu.core_type = #tpu.core_type<tc>, window_params = [{transform_indices = @transform_0, window_bounds = array<i64: 8, 4>}, {pipeline_mode = #tpu.pipeline_mode<synchronous>, transform_indices = @transform_1, window_bounds = array<i64: 288, 128>}, {transform_indices = @transform_2, window_bounds = array<i64: 8, 128>}]} {
    %c0 = arith.constant 0 : index
    %c0_0 = arith.constant 0 : index
    %0 = vector.load %arg1[%c0, %c0_0] : memref<8x4xf32, #tpu.memory_space<vmem>>, vector<8x4xf32>
    %c0_1 = arith.constant 0 : index
    %c0_2 = arith.constant 0 : index
    %1 = vector.load %arg2[%c0_1, %c0_2] : memref<288x128xf32, #tpu.memory_space<vmem>>, vector<4x128xf32>
    %c8 = arith.constant 8 : index
    %c0_3 = arith.constant 0 : index
    %2 = vector.load %arg2[%c8, %c0_3] : memref<288x128xf32, #tpu.memory_space<vmem>>, vector<1x128xf32>
    %c16 = arith.constant 16 : index
    %c0_4 = arith.constant 0 : index
    %3 = vector.load %arg2[%c16, %c0_4] : memref<288x128xf32, #tpu.memory_space<vmem>>, vector<128x128xf32>
    %c144 = arith.constant 144 : index
    %c0_5 = arith.constant 0 : index
    %4 = vector.load %arg2[%c144, %c0_5] : memref<288x128xf32, #tpu.memory_space<vmem>>, vector<1x128xf32>
    %c152 = arith.constant 152 : index
    %c0_6 = arith.constant 0 : index
    %5 = vector.load %arg2[%c152, %c0_6] : memref<288x128xf32, #tpu.memory_space<vmem>>, vector<128x128xf32>
    %c280 = arith.constant 280 : index
    %c0_7 = arith.constant 0 : index
    %6 = vector.load %arg2[%c280, %c0_7] : memref<288x128xf32, #tpu.memory_space<vmem>>, vector<1x128xf32>
    %7 = vector.shape_cast %2 : vector<1x128xf32> to vector<1x128xf32>
    %8 = vector.broadcast %7 : vector<1x128xf32> to vector<8x128xf32>
    %9 = vector.extract_strided_slice %0 {offsets = [0, 0], sizes = [8, 1], strides = [1, 1]} : vector<8x4xf32> to vector<8x1xf32>
    %10 = vector.extract_strided_slice %1 {offsets = [0, 0], sizes = [1, 128], strides = [1, 1]} : vector<4x128xf32> to vector<1x128xf32>
    %11 = vector.broadcast %9 : vector<8x1xf32> to vector<8x128xf32>
    %12 = vector.broadcast %10 : vector<1x128xf32> to vector<8x128xf32>
    %13 = arith.mulf %11, %12 : vector<8x128xf32>
    %14 = arith.addf %8, %13 : vector<8x128xf32>
    %15 = vector.extract_strided_slice %0 {offsets = [0, 1], sizes = [8, 1], strides = [1, 1]} : vector<8x4xf32> to vector<8x1xf32>
    %16 = vector.extract_strided_slice %1 {offsets = [1, 0], sizes = [1, 128], strides = [1, 1]} : vector<4x128xf32> to vector<1x128xf32>
    %17 = vector.broadcast %15 : vector<8x1xf32> to vector<8x128xf32>
    %18 = vector.broadcast %16 : vector<1x128xf32> to vector<8x128xf32>
    %19 = arith.mulf %17, %18 : vector<8x128xf32>
    %20 = arith.addf %14, %19 : vector<8x128xf32>
    %21 = vector.extract_strided_slice %0 {offsets = [0, 2], sizes = [8, 1], strides = [1, 1]} : vector<8x4xf32> to vector<8x1xf32>
    %22 = vector.extract_strided_slice %1 {offsets = [2, 0], sizes = [1, 128], strides = [1, 1]} : vector<4x128xf32> to vector<1x128xf32>
    %23 = vector.broadcast %21 : vector<8x1xf32> to vector<8x128xf32>
    %24 = vector.broadcast %22 : vector<1x128xf32> to vector<8x128xf32>
    %25 = arith.mulf %23, %24 : vector<8x128xf32>
    %26 = arith.addf %20, %25 : vector<8x128xf32>
    %27 = vector.extract_strided_slice %0 {offsets = [0, 3], sizes = [8, 1], strides = [1, 1]} : vector<8x4xf32> to vector<8x1xf32>
    %28 = vector.extract_strided_slice %1 {offsets = [3, 0], sizes = [1, 128], strides = [1, 1]} : vector<4x128xf32> to vector<1x128xf32>
    %29 = vector.broadcast %27 : vector<8x1xf32> to vector<8x128xf32>
    %30 = vector.broadcast %28 : vector<1x128xf32> to vector<8x128xf32>
    %31 = arith.mulf %29, %30 : vector<8x128xf32>
    %32 = arith.addf %26, %31 : vector<8x128xf32>
    %cst = arith.constant 0.000000e+00 : f32
    %33 = vector.broadcast %cst : f32 to vector<8x128xf32>
    %34 = arith.maximumf %32, %33 : vector<8x128xf32>
    %cst_8 = arith.constant dense<0.000000e+00> : vector<8x128xf32>
    %35 = tpu.matmul %34, %3, %cst_8 {dimension_numbers = #tpu.dot_dimension_numbers<[1], [0], [0], [1], [0, 0, 1, 1], [], []>} : vector<8x128xf32>, vector<128x128xf32>, vector<8x128xf32> -> vector<8x128xf32>
    %36 = vector.broadcast %4 : vector<1x128xf32> to vector<8x128xf32>
    %37 = arith.addf %35, %36 : vector<8x128xf32>
    %cst_9 = arith.constant 0.000000e+00 : f32
    %38 = vector.broadcast %cst_9 : f32 to vector<8x128xf32>
    %39 = arith.maximumf %37, %38 : vector<8x128xf32>
    %cst_10 = arith.constant dense<0.000000e+00> : vector<8x128xf32>
    %40 = tpu.matmul %39, %5, %cst_10 {dimension_numbers = #tpu.dot_dimension_numbers<[1], [0], [0], [1], [0, 0, 1, 1], [], []>} : vector<8x128xf32>, vector<128x128xf32>, vector<8x128xf32> -> vector<8x128xf32>
    %41 = vector.broadcast %6 : vector<1x128xf32> to vector<8x128xf32>
    %42 = arith.addf %40, %41 : vector<8x128xf32>
    %c0_11 = arith.constant 0 : index
    %c0_12 = arith.constant 0 : index
    %43 = vector.load %arg3[%c0_11, %c0_12] : memref<8x128xf32, #tpu.memory_space<vmem>>, vector<8x128xf32>
    tpu.vector_store %arg3[%c0_11, %c0_12], %42 {strides = array<i32>} : memref<8x128xf32, #tpu.memory_space<vmem>>, vector<8x128xf32>,
    return
  }
  func.func @transform_0(%arg0: i32) -> (i32, i32) {
    %c0_i32 = arith.constant 0 : i32
    %c0_i32_0 = arith.constant 0 : i32
    return %arg0, %c0_i32 : i32, i32
  }
  func.func @transform_1(%arg0: i32) -> (i32, i32) {
    %c0_i32 = arith.constant 0 : i32
    %c0_i32_0 = arith.constant 0 : i32
    %c0_i32_1 = arith.constant 0 : i32
    return %c0_i32, %c0_i32_0 : i32, i32
  }
  func.func @transform_2(%arg0: i32) -> (i32, i32) {
    %c0_i32 = arith.constant 0 : i32
    %c0_i32_0 = arith.constant 0 : i32
    return %arg0, %c0_i32 : i32, i32
  }
}

</mosaic_0001>

<llo_original>
// kernel: dqn_forward.1
$region0: #{dqn_forward.1}
  #allocation0 [shape = 'u32[]', space=smem, size = 0x4, offset = 0x4, fixed_abs, tag = 'smem constant byte address 0x4 - core index']
  #allocation1 [shape = 'u32[144,128]{1,0:T(1,128)}', space=vmem, size = 0x12000, scoped, tag = 'internal scratch']
  %s0 = inlined_call_operand.vmem [shape: f32[8,4], index: 0, kind: input, shape index: {}]
  %s1 = inlined_call_operand.vmem [shape: f32[288,128], index: 1, kind: input, shape index: {}]
  %s2 = inlined_call_operand.vmem [shape: f32[8,128], index: 2, kind: output, shape index: {}]
  %s3 = sld [smem:[#allocation0]]
  $region18: #{dqn_forward.1} parent=0
    _
  %s5 = ssub.s32 1, %s3
  %s6 = scalar_select 0, %s5, %s3
  // Predicated region
  $region2: #{dqn_forward.1} parent=0 // pred_check
    _
  $region3: #{dqn_forward.1} parent=0 // pred_check_branch
    %8 = sbr.rel (0) target = $region5
  $region4: #{dqn_forward.1} parent=0 // pred_region
    _
  $region5: #{dqn_forward.1} parent=0 // pred_fallthru
    _
  // Predicated region
  $region6: #{dqn_forward.1} parent=0 // pred_check
    _
  $region7: #{dqn_forward.1} parent=0 // pred_check_branch
    %10 = sbr.rel (0) target = $region9
  $region8: #{dqn_forward.1} parent=0 // pred_region
    _
  $region9: #{dqn_forward.1} parent=0 // pred_fallthru
    _
  %v11 = vld [vmem:[%s0] sm:$0xff]
  %v12 = vld [vmem:[%s1] sm:$0xf]
  %v13 = vld [vmem:[%s1 + $0x8] sm:$0x1]
  %v14 = vld [vmem:[%s1 + $0x10] sm:$0xff]
  %v15 = vld [vmem:[%s1 + $0x18] sm:$0xff]
  %v16 = vld [vmem:[%s1 + $0x20] sm:$0xff]
  %v17 = vld [vmem:[%s1 + $0x28] sm:$0xff]
  %v18 = vld [vmem:[%s1 + $0x30] sm:$0xff]
  %v19 = vld [vmem:[%s1 + $0x38] sm:$0xff]
  %v20 = vld [vmem:[%s1 + $0x40] sm:$0xff]
  %v21 = vld [vmem:[%s1 + $0x48] sm:$0xff]
  %v22 = vld [vmem:[%s1 + $0x50] sm:$0xff]
  %v23 = vld [vmem:[%s1 + $0x58] sm:$0xff]
  %v24 = vld [vmem:[%s1 + $0x60] sm:$0xff]
  %v25 = vld [vmem:[%s1 + $0x68] sm:$0xff]
  %v26 = vld [vmem:[%s1 + $0x70] sm:$0xff]
  %v27 = vld [vmem:[%s1 + $0x78] sm:$0xff]
  %v28 = vld [vmem:[%s1 + $0x80] sm:$0xff]
  %v29 = vld [vmem:[%s1 + $0x88] sm:$0xff]
  %v30 = vld [vmem:[%s1 + $0x90] sm:$0x1]
  %v31 = vld [vmem:[%s1 + $0x98] sm:$0xff]
  %v32 = vld [vmem:[%s1 + $0xa0] sm:$0xff]
  %v33 = vld [vmem:[%s1 + $0xa8] sm:$0xff]
  %v34 = vld [vmem:[%s1 + $0xb0] sm:$0xff]
  %v35 = vld [vmem:[%s1 + $0xb8] sm:$0xff]
  %v36 = vld [vmem:[%s1 + $0xc0] sm:$0xff]
  %v37 = vld [vmem:[%s1 + $0xc8] sm:$0xff]
  %v38 = vld [vmem:[%s1 + $0xd0] sm:$0xff]
  %v39 = vld [vmem:[%s1 + $0xd8] sm:$0xff]
  %v40 = vld [vmem:[%s1 + $0xe0] sm:$0xff]
  %v41 = vld [vmem:[%s1 + $0xe8] sm:$0xff]
  %v42 = vld [vmem:[%s1 + $0xf0] sm:$0xff]
  %v43 = vld [vmem:[%s1 + $0xf8] sm:$0xff]
  %v44 = vld [vmem:[%s1 + $0x100] sm:$0xff]
  %v45 = vld [vmem:[%s1 + $0x108] sm:$0xff]
  %v46 = vld [vmem:[%s1 + $0x110] sm:$0xff]
  %v47 = vld [vmem:[%s1 + $0x118] sm:$0x1]
  %v48 = vlaneseq
  %v49 = vshrl.u32 %v48, 7
  %v50 = vsub.s32 0, %v49
  %v51 = vrot.slane %v13, %v50
  %53 = vset.pattern.permute.xlu0 0
  %54 = vperm.xlu0 %53, %v11
  %v55 = vpop.permute.xlu0 %54
  %v57 = vlaneseq
  %v58 = vshrl.u32 %v57, 7
  %v59 = vsub.s32 0, %v58
  %v60 = vrot.slane %v12, %v59
  %v61 = vmul.f32 %v55, %v60
  %v62 = vadd.f32 %v51, %v61
  %63 = vset.pattern.permute.xlu0 1
  %64 = vperm.xlu0 %63, %v11
  %v65 = vpop.permute.xlu0 %64
  %v67 = vlaneseq
  %v68 = vshrl.u32 %v67, 7
  %v69 = vsub.s32 1, %v68
  %v70 = vrot.slane %v12, %v69
  %v71 = vmul.f32 %v65, %v70
  %v72 = vadd.f32 %v62, %v71
  %73 = vset.pattern.permute.xlu0 2
  %74 = vperm.xlu0 %73, %v11
  %v75 = vpop.permute.xlu0 %74
  %v77 = vlaneseq
  %v78 = vshrl.u32 %v77, 7
  %v79 = vsub.s32 2, %v78
  %v80 = vrot.slane %v12, %v79
  %v81 = vmul.f32 %v75, %v80
  %v82 = vadd.f32 %v72, %v81
  %83 = vset.pattern.permute.xlu0 3
  %84 = vperm.xlu0 %83, %v11
  %v85 = vpop.permute.xlu0 %84
  %v87 = vlaneseq
  %v88 = vshrl.u32 %v87, 7
  %v89 = vsub.s32 3, %v88
  %v90 = vrot.slane %v12, %v89
  %v91 = vmul.f32 %v85, %v90
  %v92 = vadd.f32 %v82, %v91
  %v93 = vmax.f32 %v92, 0.0
  %v94 = vlaneseq
  %v95 = vshrl.u32 %v94, 7
  %v96 = vsub.s32 0, %v95
  %v97 = vrot.slane %v30, %v96
  %98 = vmatprep.subr.mxu0 0.0
  %99 = vmatpush1.msra.mxu0 %v29
  %100 = vmatprep.subr.mxu0 0.0
  %101 = vmatpush1.msra.mxu0 %v28
  %102 = vmatprep.subr.mxu0 0.0
  %103 = vmatpush1.msra.mxu0 %v27
  %104 = vmatprep.subr.mxu0 0.0
  %105 = vmatpush1.msra.mxu0 %v26
  %106 = vmatprep.subr.mxu0 0.0
  %107 = vmatpush1.msra.mxu0 %v25
  %108 = vmatprep.subr.mxu0 0.0
  %109 = vmatpush1.msra.mxu0 %v24
  %110 = vmatprep.subr.mxu0 0.0
  %111 = vmatpush1.msra.mxu0 %v23
  %112 = vmatprep.subr.mxu0 0.0
  %113 = vmatpush1.msra.mxu0 %v22
  %114 = vmatprep.subr.mxu0 0.0
  %115 = vmatpush1.msra.mxu0 %v21
  %116 = vmatprep.subr.mxu0 0.0
  %117 = vmatpush1.msra.mxu0 %v20
  %118 = vmatprep.subr.mxu0 0.0
  %119 = vmatpush1.msra.mxu0 %v19
  %120 = vmatprep.subr.mxu0 0.0
  %121 = vmatpush1.msra.mxu0 %v18
  %122 = vmatprep.subr.mxu0 0.0
  %123 = vmatpush1.msra.mxu0 %v17
  %124 = vmatprep.subr.mxu0 0.0
  %125 = vmatpush1.msra.mxu0 %v16
  %126 = vmatprep.subr.mxu0 0.0
  %127 = vmatpush1.msra.mxu0 %v15
  %128 = vmatprep.subr.mxu0 0.0
  %129 = vmatpush1.msra.mxu0 %v14
  %130 = vmatprep.subr.mxu0 0.0
  %131 = vmatpush2.msra.mxu0 0.0
  %132 = vmatprep.subr.mxu0 0.0
  %133 = vmatpush2.msra.mxu0 0.0
  %134 = vmatprep.subr.mxu0 0.0
  %135 = vmatpush2.msra.mxu0 0.0
  %136 = vmatprep.subr.mxu0 0.0
  %137 = vmatpush2.msra.mxu0 0.0
  %138 = vmatprep.subr.mxu0 0.0
  %139 = vmatpush2.msra.mxu0 0.0
  %140 = vmatprep.subr.mxu0 0.0
  %141 = vmatpush2.msra.mxu0 0.0
  %142 = vmatprep.subr.mxu0 0.0
  %143 = vmatpush2.msra.mxu0 0.0
  %144 = vmatprep.subr.mxu0 0.0
  %145 = vmatpush2.msra.mxu0 0.0
  %146 = vmatprep.subr.mxu0 0.0
  %147 = vmatpush2.msra.mxu0 0.0
  %148 = vmatprep.subr.mxu0 0.0
  %149 = vmatpush2.msra.mxu0 0.0
  %150 = vmatprep.subr.mxu0 0.0
  %151 = vmatpush2.msra.mxu0 0.0
  %152 = vmatprep.subr.mxu0 0.0
  %153 = vmatpush2.msra.mxu0 0.0
  %154 = vmatprep.subr.mxu0 0.0
  %155 = vmatpush2.msra.mxu0 0.0
  %156 = vmatprep.subr.mxu0 0.0
  %157 = vmatpush2.msra.mxu0 0.0
  %158 = vmatprep.subr.mxu0 0.0
  %159 = vmatpush2.msra.mxu0 0.0
  %160 = vmatprep.subr.mxu0 0.0
  %161 = vmatpush2.msra.mxu0 0.0
  %162 = vmatprep.mubr.f32.mxu0 0.0
  %163 = vmatmul.mubr.f32.gmra.mxu0 %v93
  %v164 = vpop.f32.mrf.mxu0
  %v165 = vadd.f32 %v97, %v164
  %v166 = vpop.f32.mrf.mxu0
  %167 = vdwg.mxu0
  %v168 = vmax.f32 %v165, 0.0
  %v169 = vlaneseq
  %v170 = vshrl.u32 %v169, 7
  %v171 = vsub.s32 0, %v170
  %v172 = vrot.slane %v47, %v171
  %173 = vmatprep.subr.mxu0 0.0
  %174 = vmatpush1.msra.mxu0 %v46
  %175 = vmatprep.subr.mxu0 0.0
  %176 = vmatpush1.msra.mxu0 %v45
  %177 = vmatprep.subr.mxu0 0.0
  %178 = vmatpush1.msra.mxu0 %v44
  %179 = vmatprep.subr.mxu0 0.0
  %180 = vmatpush1.msra.mxu0 %v43
  %181 = vmatprep.subr.mxu0 0.0
  %182 = vmatpush1.msra.mxu0 %v42
  %183 = vmatprep.subr.mxu0 0.0
  %184 = vmatpush1.msra.mxu0 %v41
  %185 = vmatprep.subr.mxu0 0.0
  %186 = vmatpush1.msra.mxu0 %v40
  %187 = vmatprep.subr.mxu0 0.0
  %188 = vmatpush1.msra.mxu0 %v39
  %189 = vmatprep.subr.mxu0 0.0
  %190 = vmatpush1.msra.mxu0 %v38
  %191 = vmatprep.subr.mxu0 0.0
  %192 = vmatpush1.msra.mxu0 %v37
  %193 = vmatprep.subr.mxu0 0.0
  %194 = vmatpush1.msra.mxu0 %v36
  %195 = vmatprep.subr.mxu0 0.0
  %196 = vmatpush1.msra.mxu0 %v35
  %197 = vmatprep.subr.mxu0 0.0
  %198 = vmatpush1.msra.mxu0 %v34
  %199 = vmatprep.subr.mxu0 0.0
  %200 = vmatpush1.msra.mxu0 %v33
  %201 = vmatprep.subr.mxu0 0.0
  %202 = vmatpush1.msra.mxu0 %v32
  %203 = vmatprep.subr.mxu0 0.0
  %204 = vmatpush1.msra.mxu0 %v31
  %205 = vmatprep.subr.mxu0 0.0
  %206 = vmatpush2.msra.mxu0 0.0
  %207 = vmatprep.subr.mxu0 0.0
  %208 = vmatpush2.msra.mxu0 0.0
  %209 = vmatprep.subr.mxu0 0.0
  %210 = vmatpush2.msra.mxu0 0.0
  %211 = vmatprep.subr.mxu0 0.0
  %212 = vmatpush2.msra.mxu0 0.0
  %213 = vmatprep.subr.mxu0 0.0
  %214 = vmatpush2.msra.mxu0 0.0
  %215 = vmatprep.subr.mxu0 0.0
  %216 = vmatpush2.msra.mxu0 0.0
  %217 = vmatprep.subr.mxu0 0.0
  %218 = vmatpush2.msra.mxu0 0.0
  %219 = vmatprep.subr.mxu0 0.0
  %220 = vmatpush2.msra.mxu0 0.0
  %221 = vmatprep.subr.mxu0 0.0
  %222 = vmatpush2.msra.mxu0 0.0
  %223 = vmatprep.subr.mxu0 0.0
  %224 = vmatpush2.msra.mxu0 0.0
  %225 = vmatprep.subr.mxu0 0.0
  %226 = vmatpush2.msra.mxu0 0.0
  %227 = vmatprep.subr.mxu0 0.0
  %228 = vmatpush2.msra.mxu0 0.0
  %229 = vmatprep.subr.mxu0 0.0
  %230 = vmatpush2.msra.mxu0 0.0
  %231 = vmatprep.subr.mxu0 0.0
  %232 = vmatpush2.msra.mxu0 0.0
  %233 = vmatprep.subr.mxu0 0.0
  %234 = vmatpush2.msra.mxu0 0.0
  %235 = vmatprep.subr.mxu0 0.0
  %236 = vmatpush2.msra.mxu0 0.0
  %237 = vmatprep.mubr.f32.mxu0 0.0
  %238 = vmatmul.mubr.f32.gmra.mxu0 %v168
  %v239 = vpop.f32.mrf.mxu0
  %v240 = vadd.f32 %v172, %v239
  %v241 = vpop.f32.mrf.mxu0
  %242 = vdwg.mxu0
  %243 = vst [vmem:[%s2] sm:$0xff] %v240
  // Predicated region
  $region10: #{dqn_forward.1} parent=0 // pred_check
    _
  $region11: #{dqn_forward.1} parent=0 // pred_check_branch
    %245 = sbr.rel (0) target = $region13
  $region12: #{dqn_forward.1} parent=0 // pred_region
    _
  $region13: #{dqn_forward.1} parent=0 // pred_fallthru
    _
  // Predicated region
  $region14: #{dqn_forward.1} parent=0 // pred_check
    _
  $region15: #{dqn_forward.1} parent=0 // pred_check_branch
    %247 = sbr.rel (0) target = $region17
  $region16: #{dqn_forward.1} parent=0 // pred_region
    _
  $region17: #{dqn_forward.1} parent=0 // pred_fallthru
    _

</llo_original>
